<compile_context>
chip_gen: v6e
topology: v6e:2x2x1
jax: 0.10.0
libtpu: 0.0.40
codegen_flags: <defaults>
</compile_context>

<pallas_src>
import functools
import math

import jax
import jax.numpy as jnp
from jax.experimental import pallas as pl
from jax.experimental.pallas import tpu as pltpu


def _round_up(n, m):
    return ((n + m - 1) // m) * m


def _vmem_capacity_bytes():
    try:
        return int(pltpu.get_tpu_info().vmem_capacity_bytes)
    except Exception:
        return 64 << 20  # conservative: v7x per-TC VMEM


# ---------------------------------------------------------------------------
# Kernels
# ---------------------------------------------------------------------------

def _mlp_kernel_resident(use_relu, x_ref, w1_ref, b1_ref, w2_ref, b2_ref,
                         o_ref, h_ref):
    """Both weight matrices resident in VMEM; 1-D grid over row tiles."""
    h = jnp.dot(x_ref[...], w1_ref[...], preferred_element_type=jnp.float32)
    h = h + b1_ref[...]
    if use_relu:
        h = jnp.maximum(h, 0.0)
    # TODO(synk): dropout (dropout_r > 0, training mode) not implemented.
    h_ref[...] = h.astype(h_ref.dtype)     # stage intermediate (bounds vregs)
    y = jnp.dot(h_ref[...], w2_ref[...], preferred_element_type=jnp.float32)
    o_ref[...] = (y + b2_ref[...]).astype(o_ref.dtype)


def _mlp_kernel_midchunk(use_relu, x_ref, w1_ref, b1_ref, w2_ref, b2_ref,
                         o_ref, acc_ref):
    """mid (hidden) axis chunked as a reduction grid axis; f32 accumulator."""
    k = pl.program_id(1)

    @pl.when(k == 0)
    def _():
        acc_ref[...] = jnp.zeros_like(acc_ref)

    h = jnp.dot(x_ref[...], w1_ref[...], preferred_element_type=jnp.float32)
    h = h + b1_ref[...]
    if use_relu:
        h = jnp.maximum(h, 0.0)
    # TODO(synk): dropout (dropout_r > 0, training mode) not implemented.
    acc_ref[...] += jnp.dot(h.astype(w2_ref.dtype), w2_ref[...],
                            preferred_element_type=jnp.float32)

    @pl.when(k == pl.num_programs(1) - 1)
    def _():
        o_ref[...] = (acc_ref[...] + b2_ref[...]).astype(o_ref.dtype)


# ---------------------------------------------------------------------------
# Parameter preparation (hoisted out of the per-call path)
# ---------------------------------------------------------------------------

def prepare_mlp_params(w1, b1, w2, b2, compute_dtype=jnp.bfloat16):
    """Pad feature dims to lane-dense multiples of 128 and cast weights to the
    MXU compute dtype ONCE.  Returns a dict consumed by mlp_pallas_prepared."""
    in_size, mid_size = w1.shape
    out_size = w2.shape[1]
    assert b1.shape == (mid_size,) and b2.shape == (out_size,)
    cdt = jnp.dtype(compute_dtype)

    in_p = _round_up(in_size, 128)
    mid_p = _round_up(mid_size, 128)
    out_p = _round_up(out_size, 128)

    def pad2(a, r, c):
        if a.shape != (r, c):
            a = jnp.pad(a, ((0, r - a.shape[0]), (0, c - a.shape[1])))
        return a

    # Zero-padding is exact: zero x cols x zero w1 rows contribute 0; padded mid
    # cols have b1=0 -> ReLU(0)=0 and zero w2 rows; padded out cols are sliced off.
    w1_p = pad2(w1, in_p, mid_p).astype(cdt)
    w2_p = pad2(w2, mid_p, out_p).astype(cdt)
    b1_p = b1 if mid_p == mid_size else jnp.pad(b1, (0, mid_p - mid_size))
    b2_p = b2 if out_p == out_size else jnp.pad(b2, (0, out_p - out_size))
    b1_p = b1_p.astype(jnp.float32).reshape(1, mid_p)
    b2_p = b2_p.astype(jnp.float32).reshape(1, out_p)

    return dict(w1=w1_p, b1=b1_p, w2=w2_p, b2=b2_p,
                in_size=in_size, mid_size=mid_size, out_size=out_size,
                compute_dtype=cdt)


# ---------------------------------------------------------------------------
# Forward pass
# ---------------------------------------------------------------------------

def mlp_pallas_prepared(x, params, *, row_tile=512, mid_chunk=None,
                        use_relu=True, dropout_r=0.0):
    """x: (..., in_size); params from prepare_mlp_params."""
    assert dropout_r == 0.0, "dropout_r > 0 not implemented (eval mode only)"
    assert row_tile % 8 == 0, "row_tile must be a multiple of 8 (sublane)"

    w1_p, b1_p, w2_p, b2_p = params["w1"], params["b1"], params["w2"], params["b2"]
    in_size = params["in_size"]
    out_size = params["out_size"]
    cdt = params["compute_dtype"]
    in_p, mid_p = w1_p.shape
    out_p = w2_p.shape[1]

    assert x.shape[-1] == in_size
    lead = x.shape[:-1]
    out_dtype = x.dtype

    x2 = x.reshape(-1, in_size)
    M = x2.shape[0]
    if M == 0:
        return jnp.zeros((*lead, out_size), out_dtype)

    # Lane-dense input features: pad / cast only when not already a no-op.
    if in_p != in_size:
        x2 = jnp.pad(x2, ((0, 0), (0, in_p - in_size)))
    if x2.dtype != cdt:
        x2 = x2.astype(cdt)

    cbytes = cdt.itemsize
    obytes = jnp.dtype(out_dtype).itemsize

    # Row tile: large enough to amortize per-step overhead, but keep >= 2 row
    # steps so the "parallel" axis can be sharded across TensorCores.
    tm = max(8, min(_round_up(row_tile, 8), _round_up(pl.cdiv(M, 2), 8)))

    vmem_cap = _vmem_capacity_bytes()
    vmem_budget = int(0.85 * vmem_cap)      # headroom for Mosaic internal scratch

    # Resident-weight footprint: weights/biases single-buffered, x/out double.
    weight_bytes = (in_p * mid_p + mid_p * out_p) * cbytes + (mid_p + out_p) * 4

    def resident_bytes(tm_):
        return (weight_bytes
                + 2 * tm_ * in_p * cbytes      # x tile (double-buffered)
                + 2 * tm_ * out_p * obytes     # out tile (double-buffered)
                + tm_ * mid_p * cbytes)        # h staging scratch

    use_midchunk = (mid_chunk is not None) or (weight_bytes > vmem_budget // 3)
    if not use_midchunk:
        while tm > 64 and resident_bytes(tm) > vmem_budget:
            tm = max(64, _round_up(tm // 2, 8))
        if resident_bytes(tm) > vmem_budget:
            use_midchunk = True

    tk = n_k = None
    if use_midchunk:
        def chunk_bytes(tm_, tk_):
            return (2 * (in_p * tk_ + tk_ * out_p) * cbytes   # streamed weight chunks
                    + 2 * (tk_ + out_p) * 4                   # b1 chunk, b2
                    + 2 * tm_ * in_p * cbytes                 # x tile
                    + 2 * tm_ * out_p * obytes                # out tile
                    + tm_ * out_p * 4)                        # f32 accumulator
        if mid_chunk is not None:
            tk = int(mid_chunk)
            assert tk % 128 == 0 and mid_p % tk == 0, \
                "mid_chunk must be a multiple of 128 dividing the padded mid dim"
        else:
            cands = [c for c in (2048, 1024, 512, 256, 128) if mid_p % c == 0]
            tk = next((c for c in cands if chunk_bytes(tm, c) <= vmem_budget),
                      cands[-1] if cands else 128)
        n_k = mid_p // tk

    n_rows = pl.cdiv(M, tm)     # ragged M handled by Pallas partial last block

    cost = pl.CostEstimate(
        flops=2 * M * (in_p * mid_p + mid_p * out_p),
        transcendentals=0,
        bytes_accessed=(M * in_p * cbytes + M * out_p * obytes
                        + (in_p * mid_p + mid_p * out_p) * cbytes
                        + (mid_p + out_p) * 4),
    )

    def run(single_buffer_weights):
        def wspec(shape, index_map):
            # Grid-invariant operands: single-buffer to halve weight residency.
            if single_buffer_weights:
                return pl.BlockSpec(shape, index_map,
                                    pipeline_mode=pl.Buffered(1))
            return pl.BlockSpec(shape, index_map)

        if not use_midchunk:
            grid = (n_rows,)
            in_specs = [
                pl.BlockSpec((tm, in_p), lambda i: (i, 0)),
                wspec((in_p, mid_p), lambda i: (0, 0)),
                wspec((1, mid_p), lambda i: (0, 0)),
                wspec((mid_p, out_p), lambda i: (0, 0)),
                wspec((1, out_p), lambda i: (0, 0)),
            ]
            out_specs = pl.BlockSpec((tm, out_p), lambda i: (i, 0))
            scratch = [pltpu.VMEM((tm, mid_p), cdt)]
            kernel = functools.partial(_mlp_kernel_resident, use_relu)
            dims = ("parallel",)
            need = resident_bytes(tm)
        else:
            grid = (n_rows, n_k)
            in_specs = [
                pl.BlockSpec((tm, in_p), lambda i, k: (i, 0)),
                pl.BlockSpec((in_p, tk), lambda i, k: (0, k)),
                pl.BlockSpec((1, tk), lambda i, k: (0, k)),
                pl.BlockSpec((tk, out_p), lambda i, k: (k, 0)),
                wspec((1, out_p), lambda i, k: (0, 0)),
            ]
            out_specs = pl.BlockSpec((tm, out_p), lambda i, k: (i, 0))
            scratch = [pltpu.VMEM((tm, out_p), jnp.float32)]
            kernel = functools.partial(_mlp_kernel_midchunk, use_relu)
            dims = ("parallel", "arbitrary")
            need = chunk_bytes(tm, tk)

        vmem_limit = max(32 << 20, min(need + (8 << 20), int(0.9 * vmem_cap)))

        return pl.pallas_call(
            kernel,
            out_shape=jax.ShapeDtypeStruct((M, out_p), out_dtype),
            grid_spec=pltpu.PrefetchScalarGridSpec(
                num_scalar_prefetch=0,
                grid=grid,
                in_specs=in_specs,
                out_specs=out_specs,
                scratch_shapes=scratch,
            ),
            compiler_params=pltpu.CompilerParams(
                dimension_semantics=dims,
                vmem_limit_bytes=vmem_limit,
            ),
            cost_estimate=cost,
        )(x2, w1_p, b1_p, w2_p, b2_p)

    try:
        out = run(True)
    except Exception:
        # pl.Buffered(1) (single-buffered grid-invariant weights) not supported
        # by this JAX build -> fall back to default double-buffering.
        out = run(False)

    if out_p != out_size:
        out = out[:, :out_size]
    return out.reshape(*lead, out_size)


def mlp_pallas(x, w1, b1, w2, b2, *, compute_dtype=jnp.bfloat16, **kwargs):
    """Convenience wrapper: prepares (pads/casts) params per call.  For repeated
    forwards, call prepare_mlp_params once and use mlp_pallas_prepared."""
    params = prepare_mlp_params(w1, b1, w2, b2, compute_dtype=compute_dtype)
    return mlp_pallas_prepared(x, params, **kwargs)


# ---------------------------------------------------------------------------
# Init / reference / test
# ---------------------------------------------------------------------------

def init_mlp_params(key, in_size, mid_size, out_size, dtype=jnp.float32):
    """nn.Linear-style init: uniform(-1/sqrt(fan_in), 1/sqrt(fan_in)); weights
    pre-transposed to (fan_in, fan_out)."""
    k1, k2, k3, k4 = jax.random.split(key, 4)
    lim1 = 1.0 / math.sqrt(in_size)
    lim2 = 1.0 / math.sqrt(mid_size)
    w1 = jax.random.uniform(k1, (in_size, mid_size), dtype, -lim1, lim1)
    b1 = jax.random.uniform(k2, (mid_size,), dtype, -lim1, lim1)
    w2 = jax.random.uniform(k3, (mid_size, out_size), dtype, -lim2, lim2)
    b2 = jax.random.uniform(k4, (out_size,), dtype, -lim2, lim2)
    return w1, b1, w2, b2


def mlp_reference(x, w1, b1, w2, b2):
    h = jnp.maximum(x @ w1 + b1, 0.0)
    return h @ w2 + b2


if __name__ == "__main__":
    key = jax.random.PRNGKey(0)
    kx, kp, kr, kp2 = jax.random.split(key, 4)

    batch, seq = 2, 8
    in_size, mid_size, out_size = 32, 64, 32

    x = jax.random.normal(kx, (batch, seq, in_size), jnp.float32)
    w1, b1, w2, b2 = init_mlp_params(kp, in_size, mid_size, out_size)
    y_ref = mlp_reference(x, w1, b1, w2, b2)

    # f32 MXU feed (tight tolerance); params prepared once (hoisted pad/cast).
    params_f32 = prepare_mlp_params(w1, b1, w2, b2, compute_dtype=jnp.float32)
    y = jax.block_until_ready(mlp_pallas_prepared(x, params_f32))
    assert y.shape == (batch, seq, out_size)
    assert jnp.allclose(y, y_ref, atol=1e-5, rtol=1e-5)

    # Default bf16 MXU feed with f32 accumulation (loose tolerance).
    params_bf16 = prepare_mlp_params(w1, b1, w2, b2)
    y_bf = jax.block_until_ready(mlp_pallas_prepared(x, params_bf16))
    assert jnp.allclose(y_bf.astype(jnp.float32), y_ref, atol=5e-2, rtol=5e-2)

    # Ragged leading dims (M not a multiple of the row tile): partial last block.
    xr = jax.random.normal(kr, (3, 5, in_size), jnp.float32)
    yr = jax.block_until_ready(mlp_pallas_prepared(xr, params_f32))
    assert yr.shape == (3, 5, out_size)
    assert jnp.allclose(yr, mlp_reference(xr, w1, b1, w2, b2), atol=1e-5, rtol=1e-5)

    # Explicitly exercise the mid-chunked (reduction grid axis) variant.
    mid2 = 256
    w1b, b1b, w2b, b2b = init_mlp_params(kp2, in_size, mid2, out_size)
    params_chunk = prepare_mlp_params(w1b, b1b, w2b, b2b, compute_dtype=jnp.float32)
    yc = jax.block_until_ready(mlp_pallas_prepared(x, params_chunk, mid_chunk=128))
    assert yc.shape == (batch, seq, out_size)
    assert jnp.allclose(yc, mlp_reference(x, w1b, b1b, w2b, b2b), atol=1e-4, rtol=1e-4)

    print("KERNEL_OK")
</pallas_src>

<mosaic_0001>
module attributes {stable_mosaic.version = 11 : i64} {
  func.func @_mlp_kernel_resident(%arg0: i32, %arg1: memref<8x128xf32, #tpu.memory_space<vmem>>, %arg2: memref<128x128xf32, #tpu.memory_space<vmem>>, %arg3: memref<1x128xf32, #tpu.memory_space<vmem>>, %arg4: memref<128x128xf32, #tpu.memory_space<vmem>>, %arg5: memref<1x128xf32, #tpu.memory_space<vmem>>, %arg6: memref<8x128xf32, #tpu.memory_space<vmem>>, %arg7: memref<8x128xf32, #tpu.memory_space<vmem>>) attributes {dimension_semantics = [#tpu.dimension_semantics<parallel>], iteration_bounds = array<i64: 2>, scalar_prefetch = 0 : i64, scratch_operands = 1 : i64, tpu.core_type = #tpu.core_type<tc>, window_params = [{transform_indices = @transform_0, window_bounds = array<i64: 8, 128>}, {pipeline_mode = #tpu.pipeline_mode<synchronous>, transform_indices = @transform_1, window_bounds = array<i64: 128, 128>}, {pipeline_mode = #tpu.pipeline_mode<synchronous>, transform_indices = @transform_2, window_bounds = array<i64: 1, 128>}, {pipeline_mode = #tpu.pipeline_mode<synchronous>, transform_indices = @transform_3, window_bounds = array<i64: 128, 128>}, {pipeline_mode = #tpu.pipeline_mode<synchronous>, transform_indices = @transform_4, window_bounds = array<i64: 1, 128>}, {transform_indices = @transform_5, window_bounds = array<i64: 8, 128>}]} {
    %c0 = arith.constant 0 : index
    %c0_0 = arith.constant 0 : index
    %0 = vector.load %arg1[%c0, %c0_0] : memref<8x128xf32, #tpu.memory_space<vmem>>, vector<8x128xf32>
    %c0_1 = arith.constant 0 : index
    %c0_2 = arith.constant 0 : index
    %1 = vector.load %arg2[%c0_1, %c0_2] : memref<128x128xf32, #tpu.memory_space<vmem>>, vector<128x128xf32>
    %cst = arith.constant dense<0.000000e+00> : vector<8x128xf32>
    %2 = tpu.matmul %0, %1, %cst {dimension_numbers = #tpu.dot_dimension_numbers<[1], [0], [0], [1], [0, 0, 1, 1], [], []>} : vector<8x128xf32>, vector<128x128xf32>, vector<8x128xf32> -> vector<8x128xf32>
    %c0_3 = arith.constant 0 : index
    %c0_4 = arith.constant 0 : index
    %3 = vector.load %arg3[%c0_3, %c0_4] : memref<1x128xf32, #tpu.memory_space<vmem>>, vector<1x128xf32>
    %4 = vector.broadcast %3 : vector<1x128xf32> to vector<8x128xf32>
    %5 = arith.addf %2, %4 : vector<8x128xf32>
    %cst_5 = arith.constant 0.000000e+00 : f32
    %6 = vector.broadcast %cst_5 : f32 to vector<8x128xf32>
    %7 = arith.maximumf %5, %6 : vector<8x128xf32>
    %c0_6 = arith.constant 0 : index
    %c0_7 = arith.constant 0 : index
    %8 = vector.load %arg7[%c0_6, %c0_7] : memref<8x128xf32, #tpu.memory_space<vmem>>, vector<8x128xf32>
    tpu.vector_store %arg7[%c0_6, %c0_7], %7 {strides = array<i32>} : memref<8x128xf32, #tpu.memory_space<vmem>>, vector<8x128xf32>,
    %c0_8 = arith.constant 0 : index
    %c0_9 = arith.constant 0 : index
    %9 = vector.load %arg7[%c0_8, %c0_9] : memref<8x128xf32, #tpu.memory_space<vmem>>, vector<8x128xf32>
    %c0_10 = arith.constant 0 : index
    %c0_11 = arith.constant 0 : index
    %10 = vector.load %arg4[%c0_10, %c0_11] : memref<128x128xf32, #tpu.memory_space<vmem>>, vector<128x128xf32>
    %cst_12 = arith.constant dense<0.000000e+00> : vector<8x128xf32>
    %11 = tpu.matmul %9, %10, %cst_12 {dimension_numbers = #tpu.dot_dimension_numbers<[1], [0], [0], [1], [0, 0, 1, 1], [], []>} : vector<8x128xf32>, vector<128x128xf32>, vector<8x128xf32> -> vector<8x128xf32>
    %c0_13 = arith.constant 0 : index
    %c0_14 = arith.constant 0 : index
    %12 = vector.load %arg5[%c0_13, %c0_14] : memref<1x128xf32, #tpu.memory_space<vmem>>, vector<1x128xf32>
    %13 = vector.broadcast %12 : vector<1x128xf32> to vector<8x128xf32>
    %14 = arith.addf %11, %13 : vector<8x128xf32>
    %c0_15 = arith.constant 0 : index
    %c0_16 = arith.constant 0 : index
    %15 = vector.load %arg6[%c0_15, %c0_16] : memref<8x128xf32, #tpu.memory_space<vmem>>, vector<8x128xf32>
    tpu.vector_store %arg6[%c0_15, %c0_16], %14 {strides = array<i32>} : memref<8x128xf32, #tpu.memory_space<vmem>>, vector<8x128xf32>,
    return
  }
  func.func @transform_0(%arg0: i32) -> (i32, i32) {
    %c0_i32 = arith.constant 0 : i32
    %c0_i32_0 = arith.constant 0 : i32
    return %arg0, %c0_i32 : i32, i32
  }
  func.func @transform_1(%arg0: i32) -> (i32, i32) {
    %c0_i32 = arith.constant 0 : i32
    %c0_i32_0 = arith.constant 0 : i32
    %c0_i32_1 = arith.constant 0 : i32
    return %c0_i32, %c0_i32_0 : i32, i32
  }
  func.func @transform_2(%arg0: i32) -> (i32, i32) {
    %c0_i32 = arith.constant 0 : i32
    %c0_i32_0 = arith.constant 0 : i32
    %c0_i32_1 = arith.constant 0 : i32
    return %c0_i32, %c0_i32_0 : i32, i32
  }
  func.func @transform_3(%arg0: i32) -> (i32, i32) {
    %c0_i32 = arith.constant 0 : i32
    %c0_i32_0 = arith.constant 0 : i32
    %c0_i32_1 = arith.constant 0 : i32
    return %c0_i32, %c0_i32_0 : i32, i32
  }
  func.func @transform_4(%arg0: i32) -> (i32, i32) {
    %c0_i32 = arith.constant 0 : i32
    %c0_i32_0 = arith.constant 0 : i32
    %c0_i32_1 = arith.constant 0 : i32
    return %c0_i32, %c0_i32_0 : i32, i32
  }
  func.func @transform_5(%arg0: i32) -> (i32, i32) {
    %c0_i32 = arith.constant 0 : i32
    %c0_i32_0 = arith.constant 0 : i32
    return %arg0, %c0_i32 : i32, i32
  }
}

module attributes {stable_mosaic.version = 11 : i64} {
  func.func @_mlp_kernel_resident(%arg0: i32, %arg1: memref<8x128xf32, #tpu.memory_space<vmem>>, %arg2: memref<128x128xf32, #tpu.memory_space<vmem>>, %arg3: memref<1x128xf32, #tpu.memory_space<vmem>>, %arg4: memref<128x128xf32, #tpu.memory_space<vmem>>, %arg5: memref<1x128xf32, #tpu.memory_space<vmem>>, %arg6: memref<8x128xf32, #tpu.memory_space<vmem>>, %arg7: memref<8x128xf32, #tpu.memory_space<vmem>>) attributes {dimension_semantics = [#tpu.dimension_semantics<parallel>], iteration_bounds = array<i64: 2>, scalar_prefetch = 0 : i64, scratch_operands = 1 : i64, tpu.core_type = #tpu.core_type<tc>, window_params = [{transform_indices = @transform_0, window_bounds = array<i64: 8, 128>}, {pipeline_mode = #tpu.pipeline_mode<synchronous>, transform_indices = @transform_1, window_bounds = array<i64: 128, 128>}, {pipeline_mode = #tpu.pipeline_mode<synchronous>, transform_indices = @transform_2, window_bounds = array<i64: 1, 128>}, {pipeline_mode = #tpu.pipeline_mode<synchronous>, transform_indices = @transform_3, window_bounds = array<i64: 128, 128>}, {pipeline_mode = #tpu.pipeline_mode<synchronous>, transform_indices = @transform_4, window_bounds = array<i64: 1, 128>}, {transform_indices = @transform_5, window_bounds = array<i64: 8, 128>}]} {
    %c0 = arith.constant 0 : index
    %c0_0 = arith.constant 0 : index
    %0 = vector.load %arg1[%c0, %c0_0] : memref<8x128xf32, #tpu.memory_space<vmem>>, vector<8x128xf32>
    %c0_1 = arith.constant 0 : index
    %c0_2 = arith.constant 0 : index
    %1 = vector.load %arg2[%c0_1, %c0_2] : memref<128x128xf32, #tpu.memory_space<vmem>>, vector<128x128xf32>
    %cst = arith.constant dense<0.000000e+00> : vector<8x128xf32>
    %2 = tpu.matmul %0, %1, %cst {dimension_numbers = #tpu.dot_dimension_numbers<[1], [0], [0], [1], [0, 0, 1, 1], [], []>} : vector<8x128xf32>, vector<128x128xf32>, vector<8x128xf32> -> vector<8x128xf32>
    %c0_3 = arith.constant 0 : index
    %c0_4 = arith.constant 0 : index
    %3 = vector.load %arg3[%c0_3, %c0_4] : memref<1x128xf32, #tpu.memory_space<vmem>>, vector<1x128xf32>
    %4 = vector.broadcast %3 : vector<1x128xf32> to vector<8x128xf32>
    %5 = arith.addf %2, %4 : vector<8x128xf32>
    %cst_5 = arith.constant 0.000000e+00 : f32
    %6 = vector.broadcast %cst_5 : f32 to vector<8x128xf32>
    %7 = arith.maximumf %5, %6 : vector<8x128xf32>
    %c0_6 = arith.constant 0 : index
    %c0_7 = arith.constant 0 : index
    %8 = vector.load %arg7[%c0_6, %c0_7] : memref<8x128xf32, #tpu.memory_space<vmem>>, vector<8x128xf32>
    tpu.vector_store %arg7[%c0_6, %c0_7], %7 {strides = array<i32>} : memref<8x128xf32, #tpu.memory_space<vmem>>, vector<8x128xf32>,
    %c0_8 = arith.constant 0 : index
    %c0_9 = arith.constant 0 : index
    %9 = vector.load %arg7[%c0_8, %c0_9] : memref<8x128xf32, #tpu.memory_space<vmem>>, vector<8x128xf32>
    %c0_10 = arith.constant 0 : index
    %c0_11 = arith.constant 0 : index
    %10 = vector.load %arg4[%c0_10, %c0_11] : memref<128x128xf32, #tpu.memory_space<vmem>>, vector<128x128xf32>
    %cst_12 = arith.constant dense<0.000000e+00> : vector<8x128xf32>
    %11 = tpu.matmul %9, %10, %cst_12 {dimension_numbers = #tpu.dot_dimension_numbers<[1], [0], [0], [1], [0, 0, 1, 1], [], []>} : vector<8x128xf32>, vector<128x128xf32>, vector<8x128xf32> -> vector<8x128xf32>
    %c0_13 = arith.constant 0 : index
    %c0_14 = arith.constant 0 : index
    %12 = vector.load %arg5[%c0_13, %c0_14] : memref<1x128xf32, #tpu.memory_space<vmem>>, vector<1x128xf32>
    %13 = vector.broadcast %12 : vector<1x128xf32> to vector<8x128xf32>
    %14 = arith.addf %11, %13 : vector<8x128xf32>
    %c0_15 = arith.constant 0 : index
    %c0_16 = arith.constant 0 : index
    %15 = vector.load %arg6[%c0_15, %c0_16] : memref<8x128xf32, #tpu.memory_space<vmem>>, vector<8x128xf32>
    tpu.vector_store %arg6[%c0_15, %c0_16], %14 {strides = array<i32>} : memref<8x128xf32, #tpu.memory_space<vmem>>, vector<8x128xf32>,
    return
  }
  func.func @transform_0(%arg0: i32) -> (i32, i32) {
    %c0_i32 = arith.constant 0 : i32
    %c0_i32_0 = arith.constant 0 : i32
    return %arg0, %c0_i32 : i32, i32
  }
  func.func @transform_1(%arg0: i32) -> (i32, i32) {
    %c0_i32 = arith.constant 0 : i32
    %c0_i32_0 = arith.constant 0 : i32
    %c0_i32_1 = arith.constant 0 : i32
    return %c0_i32, %c0_i32_0 : i32, i32
  }
  func.func @transform_2(%arg0: i32) -> (i32, i32) {
    %c0_i32 = arith.constant 0 : i32
    %c0_i32_0 = arith.constant 0 : i32
    %c0_i32_1 = arith.constant 0 : i32
    return %c0_i32, %c0_i32_0 : i32, i32
  }
  func.func @transform_3(%arg0: i32) -> (i32, i32) {
    %c0_i32 = arith.constant 0 : i32
    %c0_i32_0 = arith.constant 0 : i32
    %c0_i32_1 = arith.constant 0 : i32
    return %c0_i32, %c0_i32_0 : i32, i32
  }
  func.func @transform_4(%arg0: i32) -> (i32, i32) {
    %c0_i32 = arith.constant 0 : i32
    %c0_i32_0 = arith.constant 0 : i32
    %c0_i32_1 = arith.constant 0 : i32
    return %c0_i32, %c0_i32_0 : i32, i32
  }
  func.func @transform_5(%arg0: i32) -> (i32, i32) {
    %c0_i32 = arith.constant 0 : i32
    %c0_i32_0 = arith.constant 0 : i32
    return %arg0, %c0_i32 : i32, i32
  }
}

</mosaic_0001>

<llo_original>
// kernel: tpu_custom_call.1
$region0: #{tpu_custom_call.1}
  #allocation0 [shape = 'u32[]', space=smem, size = 0x4, offset = 0x4, fixed_abs, tag = 'smem constant byte address 0x4 - core index']
  #allocation1 [shape = 'u32[144,128]{1,0:T(1,128)}', space=vmem, size = 0x12000, scoped, tag = 'internal scratch']
  #allocation2 [shape = 'f32[8,128]{1,0:T(8,128)}', space=vmem, size = 0x1000, scoped, tag = 'scratch operand']
  %s0 = inlined_call_operand.hbm [shape: f32[16,128], index: 0, kind: input, shape index: {}]
  %s1 = inlined_call_operand.hbm [shape: f32[128,128], index: 1, kind: input, shape index: {}]
  %s2 = inlined_call_operand.vmem [shape: f32[1,128], index: 2, kind: input, shape index: {}]
  %s3 = inlined_call_operand.hbm [shape: f32[128,128], index: 3, kind: input, shape index: {}]
  %s4 = inlined_call_operand.vmem [shape: f32[1,128], index: 4, kind: input, shape index: {}]
  %s5 = inlined_call_operand.hbm [shape: f32[16,128], index: 5, kind: output, shape index: {}]
  %s6 = sld [smem:[#allocation0]]
  $region65: #{tpu_custom_call.1} parent=0
    _
  %s8 = ssub.s32 1, %s6
  %s9 = scalar_select 0, %s8, %s6
  $region1: #{tpu_custom_call.1} parent=0
    #allocation3 [shape = 'u8[8192]{0}', space=vmem, size = 0x2000, scoped, tag = 'input window, operand 0']
    #allocation4 [shape = 's32[2]{0}', space=sflag, size = 0x8, scoped, tag = 'scoped memory for tpu_custom_call.1']
    #allocation5 [shape = 's32[2]{0}', space=sflag, size = 0x8, scoped, tag = 'scoped memory for tpu_custom_call.1']
    #allocation6 [shape = 'u8[65536]{0}', space=vmem, size = 0x10000, scoped, tag = 'input window, operand 1, single buffered']
    #allocation7 [shape = 's32[1]{0}', space=sflag, size = 0x4, scoped, tag = 'scoped memory for tpu_custom_call.1']
    #allocation8 [shape = 'u8[65536]{0}', space=vmem, size = 0x10000, scoped, tag = 'input window, operand 3, single buffered']
    #allocation9 [shape = 'u8[8192]{0}', space=vmem, size = 0x2000, scoped, tag = 'output window, operand 0']
    %10 = vsyncpa [#allocation4], 0
    %s11 = scalar_lea.sflag [#allocation4], 1
    %12 = vsyncpa %s11, 0
    %13 = vsyncpa [#allocation7], 0
    %14 = vsyncpa [#allocation5], 0
    %s15 = scalar_lea.sflag [#allocation5], 1
    %16 = vsyncpa %s15, 0
    loop: start=0, step=1, limit=4
    $region2: #{tpu_custom_call.1} parent=1 // loop_pre_header
      _
    $region3: #{tpu_custom_call.1} parent=1 // loop_header
      %s18 = sphi 0, %s22
      %p19 = scmp.ge.s32.totalorder %s18, 4
      %s28 = sphi 0, %s30
      %s31 = sphi 0, %s28
      %s32 = sphi 0, %s31
      %s48 = sphi 0, %s32
      %s52 = sphi 0, %s52
      %s54 = sphi 0, %s52
      %s55 = sphi 0, %s54
      %s69 = sphi 0, %s55
      %s73 = sphi 0, %s73
      %s75 = sphi 0, %s73
      %s76 = sphi 0, %s75
      %s90 = sphi 0, %s76
      %s94 = sphi 0, %s94
      %s96 = sphi 0, %s94
      %s97 = sphi 0, %s96
      %s111 = sphi 0, %s97
      %s115 = sphi 0, %s115
      %s117 = sphi 0, %s115
      %s118 = sphi 0, %s117
      %s132 = sphi 0, %s118
      %s138 = sphi 0, %s140
      %s141 = sphi 0, %s138
      %s142 = sphi 0, %s141
      %s158 = sphi 0, %s142
    $region4: #{tpu_custom_call.1} parent=1 // loop_header_branch
      %21 = sbr.rel (%p19) target = $region8
    $region5: #{tpu_custom_call.1} parent=1 // loop_body
      %s23 = ssub.s32 %s18, 1
      %s24 = ssub.s32 %s18, 2
      %s25 = sadd.s32 %s18, 1
      %s26 = ssub.s32 %s18, %s25
      %p27 = scmp.eq.s32.totalorder %s26, 0
      %s29 = sadd.s32 %s28, 1
      %s30 = scalar_select %p27, %s28, %s29
      %p33 = pneg %p27
      %p34 = scmp.eq.s32.totalorder %s18, 1
      %p35 = por %p33, %p34
      %p36 = scmp.ne.s32.totalorder %s28, %s31
      %p37 = scmp.eq.s32.totalorder %s18, 0
      %p38 = por %p36, %p37
      %p39 = scmp.ne.s32.totalorder %s28, %s31
      %p40 = scmp.eq.s32.totalorder %s23, 1
      %p41 = por %p39, %p40
      %p42 = scmp.ne.s32.totalorder %s31, %s32
      %p43 = scmp.eq.s32.totalorder %s23, 0
      %p44 = por %p42, %p43
      %p45 = scmp.ne.s32.totalorder %s31, %s32
      %p46 = scmp.eq.s32.totalorder %s24, 1
      %p47 = por %p45, %p46
      %p49 = scmp.ne.s32.totalorder %s32, %s48
      %p50 = scmp.eq.s32.totalorder %s24, 0
      %p51 = por %p49, %p50
      %s53 = sadd.s32 %s52, 1
      %p56 = scmp.eq.s32.totalorder %s18, 1
      %p57 = scmp.ne.s32.totalorder %s52, %s54
      %p58 = scmp.eq.s32.totalorder %s18, 0
      %p59 = por %p57, %p58
      %p60 = scmp.ne.s32.totalorder %s52, %s54
      %p61 = scmp.eq.s32.totalorder %s23, 1
      %p62 = por %p60, %p61
      %p63 = scmp.ne.s32.totalorder %s54, %s55
      %p64 = scmp.eq.s32.totalorder %s23, 0
      %p65 = por %p63, %p64
      %p66 = scmp.ne.s32.totalorder %s54, %s55
      %p67 = scmp.eq.s32.totalorder %s24, 1
      %p68 = por %p66, %p67
      %p70 = scmp.ne.s32.totalorder %s55, %s69
      %p71 = scmp.eq.s32.totalorder %s24, 0
      %p72 = por %p70, %p71
      %s74 = sadd.s32 %s73, 1
      %p77 = scmp.eq.s32.totalorder %s18, 1
      %p78 = scmp.ne.s32.totalorder %s73, %s75
      %p79 = scmp.eq.s32.totalorder %s18, 0
      %p80 = por %p78, %p79
      %p81 = scmp.ne.s32.totalorder %s73, %s75
      %p82 = scmp.eq.s32.totalorder %s23, 1
      %p83 = por %p81, %p82
      %p84 = scmp.ne.s32.totalorder %s75, %s76
      %p85 = scmp.eq.s32.totalorder %s23, 0
      %p86 = por %p84, %p85
      %p87 = scmp.ne.s32.totalorder %s75, %s76
      %p88 = scmp.eq.s32.totalorder %s24, 1
      %p89 = por %p87, %p88
      %p91 = scmp.ne.s32.totalorder %s76, %s90
      %p92 = scmp.eq.s32.totalorder %s24, 0
      %p93 = por %p91, %p92
      %s95 = sadd.s32 %s94, 1
      %p98 = scmp.eq.s32.totalorder %s18, 1
      %p99 = scmp.ne.s32.totalorder %s94, %s96
      %p100 = scmp.eq.s32.totalorder %s18, 0
      %p101 = por %p99, %p100
      %p102 = scmp.ne.s32.totalorder %s94, %s96
      %p103 = scmp.eq.s32.totalorder %s23, 1
      %p104 = por %p102, %p103
      %p105 = scmp.ne.s32.totalorder %s96, %s97
      %p106 = scmp.eq.s32.totalorder %s23, 0
      %p107 = por %p105, %p106
      %p108 = scmp.ne.s32.totalorder %s96, %s97
      %p109 = scmp.eq.s32.totalorder %s24, 1
      %p110 = por %p108, %p109
      %p112 = scmp.ne.s32.totalorder %s97, %s111
      %p113 = scmp.eq.s32.totalorder %s24, 0
      %p114 = por %p112, %p113
      %s116 = sadd.s32 %s115, 1
      %p119 = scmp.eq.s32.totalorder %s18, 1
      %p120 = scmp.ne.s32.totalorder %s115, %s117
      %p121 = scmp.eq.s32.totalorder %s18, 0
      %p122 = por %p120, %p121
      %p123 = scmp.ne.s32.totalorder %s115, %s117
      %p124 = scmp.eq.s32.totalorder %s23, 1
      %p125 = por %p123, %p124
      %p126 = scmp.ne.s32.totalorder %s117, %s118
      %p127 = scmp.eq.s32.totalorder %s23, 0
      %p128 = por %p126, %p127
      %p129 = scmp.ne.s32.totalorder %s117, %s118
      %p130 = scmp.eq.s32.totalorder %s24, 1
      %p131 = por %p129, %p130
      %p133 = scmp.ne.s32.totalorder %s118, %s132
      %p134 = scmp.eq.s32.totalorder %s24, 0
      %p135 = por %p133, %p134
      %s136 = ssub.s32 %s18, %s25
      %p137 = scmp.eq.s32.totalorder %s136, 0
      %s139 = sadd.s32 %s138, 1
      %s140 = scalar_select %p137, %s138, %s139
      %p143 = pneg %p137
      %p144 = scmp.eq.s32.totalorder %s18, 1
      %p145 = por %p143, %p144
      %p146 = scmp.ne.s32.totalorder %s138, %s141
      %p147 = scmp.eq.s32.totalorder %s18, 0
      %p148 = por %p146, %p147
      %p149 = scmp.ne.s32.totalorder %s138, %s141
      %p150 = scmp.eq.s32.totalorder %s23, 1
      %p151 = por %p149, %p150
      %p152 = scmp.ne.s32.totalorder %s141, %s142
      %p153 = scmp.eq.s32.totalorder %s23, 0
      %p154 = por %p152, %p153
      %p155 = scmp.ne.s32.totalorder %s141, %s142
      %p156 = scmp.eq.s32.totalorder %s24, 1
      %p157 = por %p155, %p156
      %p159 = scmp.ne.s32.totalorder %s142, %s158
      %p160 = scmp.eq.s32.totalorder %s24, 0
      %p161 = por %p159, %p160
      %p162 = scmp.le.s32.totalorder 1, %s18
      %p163 = scmp.lt.s32.totalorder %s18, 3
      %p164 = pnand %p162, %p163
      %p165 = pneg %p164
      // Predicated region
      $region9: #{tpu_custom_call.1} parent=5 // pred_check
        _
      $region10: #{tpu_custom_call.1} parent=5 // pred_check_branch
        %167 = sbr.rel (%p164) target = $region12
      $region11: #{tpu_custom_call.1} parent=5 // pred_region
        %s168 = ssub.s32 %s18, 1
        // Predicated region
        $region13: #{tpu_custom_call.1} parent=11 // pred_check
          %p169 = pneg %p65
        $region14: #{tpu_custom_call.1} parent=11 // pred_check_branch
          %171 = sbr.rel (%p169) target = $region16
        $region15: #{tpu_custom_call.1} parent=11 // pred_region
          %s173 = ssub.s32 2048, 2048
          %174 = vsyncadd [#allocation7], %s173
          %s175 = sshll.u32 [#allocation6], 4
          %s176 = int_to_ptr.vmem [resolvable:$true] %s175
          %181 = dma.hbm_to_vmem [thread:$0]  %s1, 2048, %s176, [#allocation7], 128, 128, 8
        $region16: #{tpu_custom_call.1} parent=11 // pred_fallthru
          _
        // Predicated region
        $region17: #{tpu_custom_call.1} parent=11 // pred_check
          %p182 = pneg %p86
        $region18: #{tpu_custom_call.1} parent=11 // pred_check_branch
          %184 = sbr.rel (%p182) target = $region20
        $region19: #{tpu_custom_call.1} parent=11 // pred_region
          _
        $region20: #{tpu_custom_call.1} parent=11 // pred_fallthru
          _
        // Predicated region
        $region21: #{tpu_custom_call.1} parent=11 // pred_check
          %p185 = pneg %p107
        $region22: #{tpu_custom_call.1} parent=11 // pred_check_branch
          %187 = sbr.rel (%p185) target = $region24
        $region23: #{tpu_custom_call.1} parent=11 // pred_region
          %s189 = ssub.s32 2048, 2048
          %190 = vsyncadd [#allocation7], %s189
          %s191 = sshll.u32 [#allocation8], 4
          %s192 = int_to_ptr.vmem [resolvable:$true] %s191
          %197 = dma.hbm_to_vmem [thread:$0]  %s3, 2048, %s192, [#allocation7], 128, 128, 8
        $region24: #{tpu_custom_call.1} parent=11 // pred_fallthru
          _
        // Predicated region
        $region25: #{tpu_custom_call.1} parent=11 // pred_check
          %p198 = pneg %p128
        $region26: #{tpu_custom_call.1} parent=11 // pred_check_branch
          %200 = sbr.rel (%p198) target = $region28
        $region27: #{tpu_custom_call.1} parent=11 // pred_region
          _
        $region28: #{tpu_custom_call.1} parent=11 // pred_fallthru
          _
      $region12: #{tpu_custom_call.1} parent=5 // pred_fallthru
        _
      %p201 = scmp.lt.s32.totalorder %s18, 2
      // Predicated region
      $region29: #{tpu_custom_call.1} parent=5 // pred_check
        %p202 = pneg %p201
      $region30: #{tpu_custom_call.1} parent=5 // pred_check_branch
        %204 = sbr.rel (%p202) target = $region32
      $region31: #{tpu_custom_call.1} parent=5 // pred_region
        // Predicated region
        $region33: #{tpu_custom_call.1} parent=31 // pred_check
          %p205 = pneg %p38
        $region34: #{tpu_custom_call.1} parent=31 // pred_check_branch
          %207 = sbr.rel (%p205) target = $region36
        $region35: #{tpu_custom_call.1} parent=31 // pred_region
          %s208 = sand.u32 %s28, 1
          %s209 = scalar_lea.sflag [#allocation4], %s208
          %s210 = sand.u32 %s28, 1
          %s211 = smul.addr %s210, 8
          %s212 = scalar_lea.vmem [#allocation3], %s211
          %s214 = ssub.s32 128, 128
          %215 = vsyncadd %s209, %s214
          %s216 = smul.addr %s18, 128
          %s217 = scalar_lea.hbm %s0, %s216
          %s219 = sshll.u32 %s212, 4
          %s220 = int_to_ptr.vmem [resolvable:$true] %s219
          %222 = dma.hbm_to_vmem [thread:$0]  %s217, 128, %s220, %s209
        $region36: #{tpu_custom_call.1} parent=31 // pred_fallthru
          _
      $region32: #{tpu_custom_call.1} parent=5 // pred_fallthru
        _
      %p223 = scmp.le.s32.totalorder 1, %s18
      %p224 = scmp.lt.s32.totalorder %s18, 3
      %p225 = pnand %p223, %p224
      %p226 = pneg %p225
      // Predicated region
      $region37: #{tpu_custom_call.1} parent=5 // pred_check
        _
      $region38: #{tpu_custom_call.1} parent=5 // pred_check_branch
        %228 = sbr.rel (%p225) target = $region40
      $region39: #{tpu_custom_call.1} parent=5 // pred_region
        %s229 = ssub.s32 %s18, 1
        %s230 = sand.u32 %s31, 1
        %s231 = scalar_lea.sflag [#allocation4], %s230
        %s232 = sand.u32 %s31, 1
        %s233 = smul.addr %s232, 8
        %s234 = scalar_lea.vmem [#allocation3], %s233
        // Predicated region
        $region41: #{tpu_custom_call.1} parent=39 // pred_check
          %p235 = pneg %p44
        $region42: #{tpu_custom_call.1} parent=39 // pred_check_branch
          %237 = sbr.rel (%p235) target = $region44
        $region43: #{tpu_custom_call.1} parent=39 // pred_region
          %238 = dma.done %s231, 128
        $region44: #{tpu_custom_call.1} parent=39 // pred_fallthru
          _
        // Predicated region
        $region45: #{tpu_custom_call.1} parent=39 // pred_check
          %p239 = pneg %p65
        $region46: #{tpu_custom_call.1} parent=39 // pred_check_branch
          %241 = sbr.rel (%p239) target = $region48
        $region47: #{tpu_custom_call.1} parent=39 // pred_region
          %242 = dma.done [#allocation7], 2048
        $region48: #{tpu_custom_call.1} parent=39 // pred_fallthru
          _
        // Predicated region
        $region49: #{tpu_custom_call.1} parent=39 // pred_check
          %p243 = pneg %p107
        $region50: #{tpu_custom_call.1} parent=39 // pred_check_branch
          %245 = sbr.rel (%p243) target = $region52
        $region51: #{tpu_custom_call.1} parent=39 // pred_region
          %246 = dma.done [#allocation7], 2048
        $region52: #{tpu_custom_call.1} parent=39 // pred_fallthru
          _
        %s247 = sand.u32 %s31, 1
        %s248 = scalar_lea.sflag [#allocation4], %s247
        %s249 = sand.u32 %s31, 1
        %s250 = smul.addr %s249, 8
        %s251 = scalar_lea.vmem [#allocation3], %s250
        %p252 = pneg %p44
        %p253 = pneg %p41
        %p254 = pneg %p65
        %p255 = pneg %p62
        %p256 = pneg %p86
        %p257 = pneg %p83
        %p258 = pneg %p107
        %p259 = pneg %p104
        %p260 = pneg %p128
        %p261 = pneg %p125
        %p262 = pneg %p154
        %p263 = pneg %p151
        %s264 = sand.u32 %s141, 1
        %s265 = scalar_lea.sflag [#allocation5], %s264
        %s266 = sand.u32 %s141, 1
        %s267 = smul.addr %s266, 8
        %s268 = scalar_lea.vmem [#allocation9], %s267
        %v269 = vld [vmem:[%s234] sm:$0xff]
        %v270 = vld [vmem:[#allocation6] sm:$0xff]
        %v271 = vld [vmem:[#allocation6 + $0x8] sm:$0xff]
        %v272 = vld [vmem:[#allocation6 + $0x10] sm:$0xff]
        %v273 = vld [vmem:[#allocation6 + $0x18] sm:$0xff]
        %v274 = vld [vmem:[#allocation6 + $0x20] sm:$0xff]
        %v275 = vld [vmem:[#allocation6 + $0x28] sm:$0xff]
        %v276 = vld [vmem:[#allocation6 + $0x30] sm:$0xff]
        %v277 = vld [vmem:[#allocation6 + $0x38] sm:$0xff]
        %v278 = vld [vmem:[#allocation6 + $0x40] sm:$0xff]
        %v279 = vld [vmem:[#allocation6 + $0x48] sm:$0xff]
        %v280 = vld [vmem:[#allocation6 + $0x50] sm:$0xff]
        %v281 = vld [vmem:[#allocation6 + $0x58] sm:$0xff]
        %v282 = vld [vmem:[#allocation6 + $0x60] sm:$0xff]
        %v283 = vld [vmem:[#allocation6 + $0x68] sm:$0xff]
        %v284 = vld [vmem:[#allocation6 + $0x70] sm:$0xff]
        %v285 = vld [vmem:[#allocation6 + $0x78] sm:$0xff]
        %v286 = vld [vmem:[%s2] sm:$0x1]
        %v288 = vlaneseq
        %v289 = vshrl.u32 %v288, 7
        %v290 = vsub.s32 0, %v289
        %v291 = vrot.slane %v286, %v290
        %293 = vmatprep.subr.mxu0 0.0
        %294 = vmatpush1.msra.mxu0 %v285
        %295 = vmatprep.subr.mxu0 0.0
        %296 = vmatpush1.msra.mxu0 %v284
        %297 = vmatprep.subr.mxu0 0.0
        %298 = vmatpush1.msra.mxu0 %v283
        %299 = vmatprep.subr.mxu0 0.0
        %300 = vmatpush1.msra.mxu0 %v282
        %301 = vmatprep.subr.mxu0 0.0
        %302 = vmatpush1.msra.mxu0 %v281
        %303 = vmatprep.subr.mxu0 0.0
        %304 = vmatpush1.msra.mxu0 %v280
        %305 = vmatprep.subr.mxu0 0.0
        %306 = vmatpush1.msra.mxu0 %v279
        %307 = vmatprep.subr.mxu0 0.0
        %308 = vmatpush1.msra.mxu0 %v278
        %309 = vmatprep.subr.mxu0 0.0
        %310 = vmatpush1.msra.mxu0 %v277
        %311 = vmatprep.subr.mxu0 0.0
        %312 = vmatpush1.msra.mxu0 %v276
        %313 = vmatprep.subr.mxu0 0.0
        %314 = vmatpush1.msra.mxu0 %v275
        %315 = vmatprep.subr.mxu0 0.0
        %316 = vmatpush1.msra.mxu0 %v274
        %317 = vmatprep.subr.mxu0 0.0
        %318 = vmatpush1.msra.mxu0 %v273
        %319 = vmatprep.subr.mxu0 0.0
        %320 = vmatpush1.msra.mxu0 %v272
        %321 = vmatprep.subr.mxu0 0.0
        %322 = vmatpush1.msra.mxu0 %v271
        %323 = vmatprep.subr.mxu0 0.0
        %324 = vmatpush1.msra.mxu0 %v270
        %325 = vmatprep.subr.mxu0 0.0
        %326 = vmatpush2.msra.mxu0 0.0
        %327 = vmatprep.subr.mxu0 0.0
        %328 = vmatpush2.msra.mxu0 0.0
        %329 = vmatprep.subr.mxu0 0.0
        %330 = vmatpush2.msra.mxu0 0.0
        %331 = vmatprep.subr.mxu0 0.0
        %332 = vmatpush2.msra.mxu0 0.0
        %333 = vmatprep.subr.mxu0 0.0
        %334 = vmatpush2.msra.mxu0 0.0
        %335 = vmatprep.subr.mxu0 0.0
        %336 = vmatpush2.msra.mxu0 0.0
        %337 = vmatprep.subr.mxu0 0.0
        %338 = vmatpush2.msra.mxu0 0.0
        %339 = vmatprep.subr.mxu0 0.0
        %340 = vmatpush2.msra.mxu0 0.0
        %341 = vmatprep.subr.mxu0 0.0
        %342 = vmatpush2.msra.mxu0 0.0
        %343 = vmatprep.subr.mxu0 0.0
        %344 = vmatpush2.msra.mxu0 0.0
        %345 = vmatprep.subr.mxu0 0.0
        %346 = vmatpush2.msra.mxu0 0.0
        %347 = vmatprep.subr.mxu0 0.0
        %348 = vmatpush2.msra.mxu0 0.0
        %349 = vmatprep.subr.mxu0 0.0
        %350 = vmatpush2.msra.mxu0 0.0
        %351 = vmatprep.subr.mxu0 0.0
        %352 = vmatpush2.msra.mxu0 0.0
        %353 = vmatprep.subr.mxu0 0.0
        %354 = vmatpush2.msra.mxu0 0.0
        %355 = vmatprep.subr.mxu0 0.0
        %356 = vmatpush2.msra.mxu0 0.0
        %357 = vmatprep.mubr.f32.mxu0 0.0
        %358 = vmatmul.mubr.f32.gmra.mxu0 %v269
        %v359 = vpop.f32.mrf.mxu0
        %v360 = vadd.f32 %v291, %v359
        %v361 = vpop.f32.mrf.mxu0
        %362 = vdwg.mxu0
        %v363 = vmax.f32 %v360, 0.0
        %364 = vst [vmem:[#allocation2] sm:$0xff] %v363
        %v365 = vld [vmem:[#allocation2] sm:$0xff]
        %v366 = vld [vmem:[#allocation8] sm:$0xff]
        %v367 = vld [vmem:[#allocation8 + $0x8] sm:$0xff]
        %v368 = vld [vmem:[#allocation8 + $0x10] sm:$0xff]
        %v369 = vld [vmem:[#allocation8 + $0x18] sm:$0xff]
        %v370 = vld [vmem:[#allocation8 + $0x20] sm:$0xff]
        %v371 = vld [vmem:[#allocation8 + $0x28] sm:$0xff]
        %v372 = vld [vmem:[#allocation8 + $0x30] sm:$0xff]
        %v373 = vld [vmem:[#allocation8 + $0x38] sm:$0xff]
        %v374 = vld [vmem:[#allocation8 + $0x40] sm:$0xff]
        %v375 = vld [vmem:[#allocation8 + $0x48] sm:$0xff]
        %v376 = vld [vmem:[#allocation8 + $0x50] sm:$0xff]
        %v377 = vld [vmem:[#allocation8 + $0x58] sm:$0xff]
        %v378 = vld [vmem:[#allocation8 + $0x60] sm:$0xff]
        %v379 = vld [vmem:[#allocation8 + $0x68] sm:$0xff]
        %v380 = vld [vmem:[#allocation8 + $0x70] sm:$0xff]
        %v381 = vld [vmem:[#allocation8 + $0x78] sm:$0xff]
        %v382 = vld [vmem:[%s4] sm:$0x1]
        %v384 = vlaneseq
        %v385 = vshrl.u32 %v384, 7
        %v386 = vsub.s32 0, %v385
        %v387 = vrot.slane %v382, %v386
        %389 = vmatprep.subr.mxu0 0.0
        %390 = vmatpush1.msra.mxu0 %v381
        %391 = vmatprep.subr.mxu0 0.0
        %392 = vmatpush1.msra.mxu0 %v380
        %393 = vmatprep.subr.mxu0 0.0
        %394 = vmatpush1.msra.mxu0 %v379
        %395 = vmatprep.subr.mxu0 0.0
        %396 = vmatpush1.msra.mxu0 %v378
        %397 = vmatprep.subr.mxu0 0.0
        %398 = vmatpush1.msra.mxu0 %v377
        %399 = vmatprep.subr.mxu0 0.0
        %400 = vmatpush1.msra.mxu0 %v376
        %401 = vmatprep.subr.mxu0 0.0
        %402 = vmatpush1.msra.mxu0 %v375
        %403 = vmatprep.subr.mxu0 0.0
        %404 = vmatpush1.msra.mxu0 %v374
        %405 = vmatprep.subr.mxu0 0.0
        %406 = vmatpush1.msra.mxu0 %v373
        %407 = vmatprep.subr.mxu0 0.0
        %408 = vmatpush1.msra.mxu0 %v372
        %409 = vmatprep.subr.mxu0 0.0
        %410 = vmatpush1.msra.mxu0 %v371
        %411 = vmatprep.subr.mxu0 0.0
        %412 = vmatpush1.msra.mxu0 %v370
        %413 = vmatprep.subr.mxu0 0.0
        %414 = vmatpush1.msra.mxu0 %v369
        %415 = vmatprep.subr.mxu0 0.0
        %416 = vmatpush1.msra.mxu0 %v368
        %417 = vmatprep.subr.mxu0 0.0
        %418 = vmatpush1.msra.mxu0 %v367
        %419 = vmatprep.subr.mxu0 0.0
        %420 = vmatpush1.msra.mxu0 %v366
        %421 = vmatprep.subr.mxu0 0.0
        %422 = vmatpush2.msra.mxu0 0.0
        %423 = vmatprep.subr.mxu0 0.0
        %424 = vmatpush2.msra.mxu0 0.0
        %425 = vmatprep.subr.mxu0 0.0
        %426 = vmatpush2.msra.mxu0 0.0
        %427 = vmatprep.subr.mxu0 0.0
        %428 = vmatpush2.msra.mxu0 0.0
        %429 = vmatprep.subr.mxu0 0.0
        %430 = vmatpush2.msra.mxu0 0.0
        %431 = vmatprep.subr.mxu0 0.0
        %432 = vmatpush2.msra.mxu0 0.0
        %433 = vmatprep.subr.mxu0 0.0
        %434 = vmatpush2.msra.mxu0 0.0
        %435 = vmatprep.subr.mxu0 0.0
        %436 = vmatpush2.msra.mxu0 0.0
        %437 = vmatprep.subr.mxu0 0.0
        %438 = vmatpush2.msra.mxu0 0.0
        %439 = vmatprep.subr.mxu0 0.0
        %440 = vmatpush2.msra.mxu0 0.0
        %441 = vmatprep.subr.mxu0 0.0
        %442 = vmatpush2.msra.mxu0 0.0
        %443 = vmatprep.subr.mxu0 0.0
        %444 = vmatpush2.msra.mxu0 0.0
        %445 = vmatprep.subr.mxu0 0.0
        %446 = vmatpush2.msra.mxu0 0.0
        %447 = vmatprep.subr.mxu0 0.0
        %448 = vmatpush2.msra.mxu0 0.0
        %449 = vmatprep.subr.mxu0 0.0
        %450 = vmatpush2.msra.mxu0 0.0
        %451 = vmatprep.subr.mxu0 0.0
        %452 = vmatpush2.msra.mxu0 0.0
        %453 = vmatprep.mubr.f32.mxu0 0.0
        %454 = vmatmul.mubr.f32.gmra.mxu0 %v365
        %v455 = vpop.f32.mrf.mxu0
        %v456 = vadd.f32 %v387, %v455
        %v457 = vpop.f32.mrf.mxu0
        %458 = vdwg.mxu0
        %459 = vst [vmem:[%s268] sm:$0xff] %v456
        %s460 = sand.u32 %s141, 1
        %s461 = scalar_lea.sflag [#allocation5], %s460
        %s462 = sand.u32 %s141, 1
        %s463 = smul.addr %s462, 8
        %s464 = scalar_lea.vmem [#allocation9], %s463
        // Predicated region
        $region53: #{tpu_custom_call.1} parent=39 // pred_check
          %p465 = pneg %p151
        $region54: #{tpu_custom_call.1} parent=39 // pred_check_branch
          %467 = sbr.rel (%p465) target = $region56
        $region55: #{tpu_custom_call.1} parent=39 // pred_region
          %s469 = ssub.s32 128, 128
          %470 = vsyncadd %s461, %s469
          %s471 = smul.addr %s23, 128
          %s472 = scalar_lea.hbm %s5, %s471
          %s474 = sshll.u32 %s464, 4
          %s475 = int_to_ptr.vmem [resolvable:$true] %s474
          %477 = dma.vmem_to_hbm [thread:$0]  %s475, 128, %s472, %s461
        $region56: #{tpu_custom_call.1} parent=39 // pred_fallthru
          _
      $region40: #{tpu_custom_call.1} parent=5 // pred_fallthru
        _
      %p478 = scmp.le.s32.totalorder 2, %s18
      // Predicated region
      $region57: #{tpu_custom_call.1} parent=5 // pred_check
        %p479 = pneg %p478
      $region58: #{tpu_custom_call.1} parent=5 // pred_check_branch
        %481 = sbr.rel (%p479) target = $region60
      $region59: #{tpu_custom_call.1} parent=5 // pred_region
        %s482 = ssub.s32 %s18, 2
        // Predicated region
        $region61: #{tpu_custom_call.1} parent=59 // pred_check
          %p483 = pneg %p157
        $region62: #{tpu_custom_call.1} parent=59 // pred_check_branch
          %485 = sbr.rel (%p483) target = $region64
        $region63: #{tpu_custom_call.1} parent=59 // pred_region
          %s486 = sand.u32 %s142, 1
          %s487 = scalar_lea.sflag [#allocation5], %s486
          %s488 = sand.u32 %s142, 1
          %s489 = smul.addr %s488, 8
          %s490 = scalar_lea.vmem [#allocation9], %s489
          %491 = dma.done %s487, 128
        $region64: #{tpu_custom_call.1} parent=59 // pred_fallthru
          _
      $region60: #{tpu_custom_call.1} parent=5 // pred_fallthru
        _
    $region6: #{tpu_custom_call.1} parent=1 // loop_footer
      %s22 = sadd.s32 1, %s18
    $region7: #{tpu_custom_call.1} parent=1 // loop_footer_branch
      %17 = sbr.rel target = $region3
    $region8: #{tpu_custom_call.1} parent=1 // loop_exit
      _
    %492 = vsyncpa [#allocation4], 1
    %s493 = scalar_lea.sflag [#allocation4], 1
    %494 = vsyncpa %s493, 1
    %495 = vsyncpa [#allocation7], 1
    %496 = vsyncpa [#allocation5], 1
    %s497 = scalar_lea.sflag [#allocation5], 1
    %498 = vsyncpa %s497, 1

// kernel: tpu_custom_call.1
$region0: #{tpu_custom_call.1}
  #allocation0 [shape = 'u32[]', space=smem, size = 0x4, offset = 0x4, fixed_abs, tag = 'smem constant byte address 0x4 - core index']
  #allocation1 [shape = 'u32[144,128]{1,0:T(1,128)}', space=vmem, size = 0x12000, scoped, tag = 'internal scratch']
  #allocation2 [shape = 'f32[8,128]{1,0:T(8,128)}', space=vmem, size = 0x1000, scoped, tag = 'scratch operand']
  %s0 = inlined_call_operand.hbm [shape: f32[16,128], index: 0, kind: input, shape index: {}]
  %s1 = inlined_call_operand.hbm [shape: f32[128,128], index: 1, kind: input, shape index: {}]
  %s2 = inlined_call_operand.vmem [shape: f32[1,128], index: 2, kind: input, shape index: {}]
  %s3 = inlined_call_operand.hbm [shape: f32[128,128], index: 3, kind: input, shape index: {}]
  %s4 = inlined_call_operand.vmem [shape: f32[1,128], index: 4, kind: input, shape index: {}]
  %s5 = inlined_call_operand.hbm [shape: f32[16,128], index: 5, kind: output, shape index: {}]
  %s6 = sld [smem:[#allocation0]]
  $region65: #{tpu_custom_call.1} parent=0
    _
  %s8 = ssub.s32 1, %s6
  %s9 = scalar_select 0, %s8, %s6
  $region1: #{tpu_custom_call.1} parent=0
    #allocation3 [shape = 'u8[8192]{0}', space=vmem, size = 0x2000, scoped, tag = 'input window, operand 0']
    #allocation4 [shape = 's32[2]{0}', space=sflag, size = 0x8, scoped, tag = 'scoped memory for tpu_custom_call.1']
    #allocation5 [shape = 's32[2]{0}', space=sflag, size = 0x8, scoped, tag = 'scoped memory for tpu_custom_call.1']
    #allocation6 [shape = 'u8[65536]{0}', space=vmem, size = 0x10000, scoped, tag = 'input window, operand 1, single buffered']
    #allocation7 [shape = 's32[1]{0}', space=sflag, size = 0x4, scoped, tag = 'scoped memory for tpu_custom_call.1']
    #allocation8 [shape = 'u8[65536]{0}', space=vmem, size = 0x10000, scoped, tag = 'input window, operand 3, single buffered']
    #allocation9 [shape = 'u8[8192]{0}', space=vmem, size = 0x2000, scoped, tag = 'output window, operand 0']
    %10 = vsyncpa [#allocation4], 0
    %s11 = scalar_lea.sflag [#allocation4], 1
    %12 = vsyncpa %s11, 0
    %13 = vsyncpa [#allocation7], 0
    %14 = vsyncpa [#allocation5], 0
    %s15 = scalar_lea.sflag [#allocation5], 1
    %16 = vsyncpa %s15, 0
    loop: start=0, step=1, limit=4
    $region2: #{tpu_custom_call.1} parent=1 // loop_pre_header
      _
    $region3: #{tpu_custom_call.1} parent=1 // loop_header
      %s18 = sphi 0, %s22
      %p19 = scmp.ge.s32.totalorder %s18, 4
      %s28 = sphi 0, %s30
      %s31 = sphi 0, %s28
      %s32 = sphi 0, %s31
      %s48 = sphi 0, %s32
      %s52 = sphi 0, %s52
      %s54 = sphi 0, %s52
      %s55 = sphi 0, %s54
      %s69 = sphi 0, %s55
      %s73 = sphi 0, %s73
      %s75 = sphi 0, %s73
      %s76 = sphi 0, %s75
      %s90 = sphi 0, %s76
      %s94 = sphi 0, %s94
      %s96 = sphi 0, %s94
      %s97 = sphi 0, %s96
      %s111 = sphi 0, %s97
      %s115 = sphi 0, %s115
      %s117 = sphi 0, %s115
      %s118 = sphi 0, %s117
      %s132 = sphi 0, %s118
      %s138 = sphi 0, %s140
      %s141 = sphi 0, %s138
      %s142 = sphi 0, %s141
      %s158 = sphi 0, %s142
    $region4: #{tpu_custom_call.1} parent=1 // loop_header_branch
      %21 = sbr.rel (%p19) target = $region8
    $region5: #{tpu_custom_call.1} parent=1 // loop_body
      %s23 = ssub.s32 %s18, 1
      %s24 = ssub.s32 %s18, 2
      %s25 = sadd.s32 %s18, 1
      %s26 = ssub.s32 %s18, %s25
      %p27 = scmp.eq.s32.totalorder %s26, 0
      %s29 = sadd.s32 %s28, 1
      %s30 = scalar_select %p27, %s28, %s29
      %p33 = pneg %p27
      %p34 = scmp.eq.s32.totalorder %s18, 1
      %p35 = por %p33, %p34
      %p36 = scmp.ne.s32.totalorder %s28, %s31
      %p37 = scmp.eq.s32.totalorder %s18, 0
      %p38 = por %p36, %p37
      %p39 = scmp.ne.s32.totalorder %s28, %s31
      %p40 = scmp.eq.s32.totalorder %s23, 1
      %p41 = por %p39, %p40
      %p42 = scmp.ne.s32.totalorder %s31, %s32
      %p43 = scmp.eq.s32.totalorder %s23, 0
      %p44 = por %p42, %p43
      %p45 = scmp.ne.s32.totalorder %s31, %s32
      %p46 = scmp.eq.s32.totalorder %s24, 1
      %p47 = por %p45, %p46
      %p49 = scmp.ne.s32.totalorder %s32, %s48
      %p50 = scmp.eq.s32.totalorder %s24, 0
      %p51 = por %p49, %p50
      %s53 = sadd.s32 %s52, 1
      %p56 = scmp.eq.s32.totalorder %s18, 1
      %p57 = scmp.ne.s32.totalorder %s52, %s54
      %p58 = scmp.eq.s32.totalorder %s18, 0
      %p59 = por %p57, %p58
      %p60 = scmp.ne.s32.totalorder %s52, %s54
      %p61 = scmp.eq.s32.totalorder %s23, 1
      %p62 = por %p60, %p61
      %p63 = scmp.ne.s32.totalorder %s54, %s55
      %p64 = scmp.eq.s32.totalorder %s23, 0
      %p65 = por %p63, %p64
      %p66 = scmp.ne.s32.totalorder %s54, %s55
      %p67 = scmp.eq.s32.totalorder %s24, 1
      %p68 = por %p66, %p67
      %p70 = scmp.ne.s32.totalorder %s55, %s69
      %p71 = scmp.eq.s32.totalorder %s24, 0
      %p72 = por %p70, %p71
      %s74 = sadd.s32 %s73, 1
      %p77 = scmp.eq.s32.totalorder %s18, 1
      %p78 = scmp.ne.s32.totalorder %s73, %s75
      %p79 = scmp.eq.s32.totalorder %s18, 0
      %p80 = por %p78, %p79
      %p81 = scmp.ne.s32.totalorder %s73, %s75
      %p82 = scmp.eq.s32.totalorder %s23, 1
      %p83 = por %p81, %p82
      %p84 = scmp.ne.s32.totalorder %s75, %s76
      %p85 = scmp.eq.s32.totalorder %s23, 0
      %p86 = por %p84, %p85
      %p87 = scmp.ne.s32.totalorder %s75, %s76
      %p88 = scmp.eq.s32.totalorder %s24, 1
      %p89 = por %p87, %p88
      %p91 = scmp.ne.s32.totalorder %s76, %s90
      %p92 = scmp.eq.s32.totalorder %s24, 0
      %p93 = por %p91, %p92
      %s95 = sadd.s32 %s94, 1
      %p98 = scmp.eq.s32.totalorder %s18, 1
      %p99 = scmp.ne.s32.totalorder %s94, %s96
      %p100 = scmp.eq.s32.totalorder %s18, 0
      %p101 = por %p99, %p100
      %p102 = scmp.ne.s32.totalorder %s94, %s96
      %p103 = scmp.eq.s32.totalorder %s23, 1
      %p104 = por %p102, %p103
      %p105 = scmp.ne.s32.totalorder %s96, %s97
      %p106 = scmp.eq.s32.totalorder %s23, 0
      %p107 = por %p105, %p106
      %p108 = scmp.ne.s32.totalorder %s96, %s97
      %p109 = scmp.eq.s32.totalorder %s24, 1
      %p110 = por %p108, %p109
      %p112 = scmp.ne.s32.totalorder %s97, %s111
      %p113 = scmp.eq.s32.totalorder %s24, 0
      %p114 = por %p112, %p113
      %s116 = sadd.s32 %s115, 1
      %p119 = scmp.eq.s32.totalorder %s18, 1
      %p120 = scmp.ne.s32.totalorder %s115, %s117
      %p121 = scmp.eq.s32.totalorder %s18, 0
      %p122 = por %p120, %p121
      %p123 = scmp.ne.s32.totalorder %s115, %s117
      %p124 = scmp.eq.s32.totalorder %s23, 1
      %p125 = por %p123, %p124
      %p126 = scmp.ne.s32.totalorder %s117, %s118
      %p127 = scmp.eq.s32.totalorder %s23, 0
      %p128 = por %p126, %p127
      %p129 = scmp.ne.s32.totalorder %s117, %s118
      %p130 = scmp.eq.s32.totalorder %s24, 1
      %p131 = por %p129, %p130
      %p133 = scmp.ne.s32.totalorder %s118, %s132
      %p134 = scmp.eq.s32.totalorder %s24, 0
      %p135 = por %p133, %p134
      %s136 = ssub.s32 %s18, %s25
      %p137 = scmp.eq.s32.totalorder %s136, 0
      %s139 = sadd.s32 %s138, 1
      %s140 = scalar_select %p137, %s138, %s139
      %p143 = pneg %p137
      %p144 = scmp.eq.s32.totalorder %s18, 1
      %p145 = por %p143, %p144
      %p146 = scmp.ne.s32.totalorder %s138, %s141
      %p147 = scmp.eq.s32.totalorder %s18, 0
      %p148 = por %p146, %p147
      %p149 = scmp.ne.s32.totalorder %s138, %s141
      %p150 = scmp.eq.s32.totalorder %s23, 1
      %p151 = por %p149, %p150
      %p152 = scmp.ne.s32.totalorder %s141, %s142
      %p153 = scmp.eq.s32.totalorder %s23, 0
      %p154 = por %p152, %p153
      %p155 = scmp.ne.s32.totalorder %s141, %s142
      %p156 = scmp.eq.s32.totalorder %s24, 1
      %p157 = por %p155, %p156
      %p159 = scmp.ne.s32.totalorder %s142, %s158
      %p160 = scmp.eq.s32.totalorder %s24, 0
      %p161 = por %p159, %p160
      %p162 = scmp.le.s32.totalorder 1, %s18
      %p163 = scmp.lt.s32.totalorder %s18, 3
      %p164 = pnand %p162, %p163
      %p165 = pneg %p164
      // Predicated region
      $region9: #{tpu_custom_call.1} parent=5 // pred_check
        _
      $region10: #{tpu_custom_call.1} parent=5 // pred_check_branch
        %167 = sbr.rel (%p164) target = $region12
      $region11: #{tpu_custom_call.1} parent=5 // pred_region
        %s168 = ssub.s32 %s18, 1
        // Predicated region
        $region13: #{tpu_custom_call.1} parent=11 // pred_check
          %p169 = pneg %p65
        $region14: #{tpu_custom_call.1} parent=11 // pred_check_branch
          %171 = sbr.rel (%p169) target = $region16
        $region15: #{tpu_custom_call.1} parent=11 // pred_region
          %s173 = ssub.s32 2048, 2048
          %174 = vsyncadd [#allocation7], %s173
          %s175 = sshll.u32 [#allocation6], 4
          %s176 = int_to_ptr.vmem [resolvable:$true] %s175
          %181 = dma.hbm_to_vmem [thread:$0]  %s1, 2048, %s176, [#allocation7], 128, 128, 8
        $region16: #{tpu_custom_call.1} parent=11 // pred_fallthru
          _
        // Predicated region
        $region17: #{tpu_custom_call.1} parent=11 // pred_check
          %p182 = pneg %p86
        $region18: #{tpu_custom_call.1} parent=11 // pred_check_branch
          %184 = sbr.rel (%p182) target = $region20
        $region19: #{tpu_custom_call.1} parent=11 // pred_region
          _
        $region20: #{tpu_custom_call.1} parent=11 // pred_fallthru
          _
        // Predicated region
        $region21: #{tpu_custom_call.1} parent=11 // pred_check
          %p185 = pneg %p107
        $region22: #{tpu_custom_call.1} parent=11 // pred_check_branch
          %187 = sbr.rel (%p185) target = $region24
        $region23: #{tpu_custom_call.1} parent=11 // pred_region
          %s189 = ssub.s32 2048, 2048
          %190 = vsyncadd [#allocation7], %s189
          %s191 = sshll.u32 [#allocation8], 4
          %s192 = int_to_ptr.vmem [resolvable:$true] %s191
          %197 = dma.hbm_to_vmem [thread:$0]  %s3, 2048, %s192, [#allocation7], 128, 128, 8
        $region24: #{tpu_custom_call.1} parent=11 // pred_fallthru
          _
        // Predicated region
        $region25: #{tpu_custom_call.1} parent=11 // pred_check
          %p198 = pneg %p128
        $region26: #{tpu_custom_call.1} parent=11 // pred_check_branch
          %200 = sbr.rel (%p198) target = $region28
        $region27: #{tpu_custom_call.1} parent=11 // pred_region
          _
        $region28: #{tpu_custom_call.1} parent=11 // pred_fallthru
          _
      $region12: #{tpu_custom_call.1} parent=5 // pred_fallthru
        _
      %p201 = scmp.lt.s32.totalorder %s18, 2
      // Predicated region
      $region29: #{tpu_custom_call.1} parent=5 // pred_check
        %p202 = pneg %p201
      $region30: #{tpu_custom_call.1} parent=5 // pred_check_branch
        %204 = sbr.rel (%p202) target = $region32
      $region31: #{tpu_custom_call.1} parent=5 // pred_region
        // Predicated region
        $region33: #{tpu_custom_call.1} parent=31 // pred_check
          %p205 = pneg %p38
        $region34: #{tpu_custom_call.1} parent=31 // pred_check_branch
          %207 = sbr.rel (%p205) target = $region36
        $region35: #{tpu_custom_call.1} parent=31 // pred_region
          %s208 = sand.u32 %s28, 1
          %s209 = scalar_lea.sflag [#allocation4], %s208
          %s210 = sand.u32 %s28, 1
          %s211 = smul.addr %s210, 8
          %s212 = scalar_lea.vmem [#allocation3], %s211
          %s214 = ssub.s32 128, 128
          %215 = vsyncadd %s209, %s214
          %s216 = smul.addr %s18, 128
          %s217 = scalar_lea.hbm %s0, %s216
          %s219 = sshll.u32 %s212, 4
          %s220 = int_to_ptr.vmem [resolvable:$true] %s219
          %222 = dma.hbm_to_vmem [thread:$0]  %s217, 128, %s220, %s209
        $region36: #{tpu_custom_call.1} parent=31 // pred_fallthru
          _
      $region32: #{tpu_custom_call.1} parent=5 // pred_fallthru
        _
      %p223 = scmp.le.s32.totalorder 1, %s18
      %p224 = scmp.lt.s32.totalorder %s18, 3
      %p225 = pnand %p223, %p224
      %p226 = pneg %p225
      // Predicated region
      $region37: #{tpu_custom_call.1} parent=5 // pred_check
        _
      $region38: #{tpu_custom_call.1} parent=5 // pred_check_branch
        %228 = sbr.rel (%p225) target = $region40
      $region39: #{tpu_custom_call.1} parent=5 // pred_region
        %s229 = ssub.s32 %s18, 1
        %s230 = sand.u32 %s31, 1
        %s231 = scalar_lea.sflag [#allocation4], %s230
        %s232 = sand.u32 %s31, 1
        %s233 = smul.addr %s232, 8
        %s234 = scalar_lea.vmem [#allocation3], %s233
        // Predicated region
        $region41: #{tpu_custom_call.1} parent=39 // pred_check
          %p235 = pneg %p44
        $region42: #{tpu_custom_call.1} parent=39 // pred_check_branch
          %237 = sbr.rel (%p235) target = $region44
        $region43: #{tpu_custom_call.1} parent=39 // pred_region
          %238 = dma.done %s231, 128
        $region44: #{tpu_custom_call.1} parent=39 // pred_fallthru
          _
        // Predicated region
        $region45: #{tpu_custom_call.1} parent=39 // pred_check
          %p239 = pneg %p65
        $region46: #{tpu_custom_call.1} parent=39 // pred_check_branch
          %241 = sbr.rel (%p239) target = $region48
        $region47: #{tpu_custom_call.1} parent=39 // pred_region
          %242 = dma.done [#allocation7], 2048
        $region48: #{tpu_custom_call.1} parent=39 // pred_fallthru
          _
        // Predicated region
        $region49: #{tpu_custom_call.1} parent=39 // pred_check
          %p243 = pneg %p107
        $region50: #{tpu_custom_call.1} parent=39 // pred_check_branch
          %245 = sbr.rel (%p243) target = $region52
        $region51: #{tpu_custom_call.1} parent=39 // pred_region
          %246 = dma.done [#allocation7], 2048
        $region52: #{tpu_custom_call.1} parent=39 // pred_fallthru
          _
        %s247 = sand.u32 %s31, 1
        %s248 = scalar_lea.sflag [#allocation4], %s247
        %s249 = sand.u32 %s31, 1
        %s250 = smul.addr %s249, 8
        %s251 = scalar_lea.vmem [#allocation3], %s250
        %p252 = pneg %p44
        %p253 = pneg %p41
        %p254 = pneg %p65
        %p255 = pneg %p62
        %p256 = pneg %p86
        %p257 = pneg %p83
        %p258 = pneg %p107
        %p259 = pneg %p104
        %p260 = pneg %p128
        %p261 = pneg %p125
        %p262 = pneg %p154
        %p263 = pneg %p151
        %s264 = sand.u32 %s141, 1
        %s265 = scalar_lea.sflag [#allocation5], %s264
        %s266 = sand.u32 %s141, 1
        %s267 = smul.addr %s266, 8
        %s268 = scalar_lea.vmem [#allocation9], %s267
        %v269 = vld [vmem:[%s234] sm:$0xff]
        %v270 = vld [vmem:[#allocation6] sm:$0xff]
        %v271 = vld [vmem:[#allocation6 + $0x8] sm:$0xff]
        %v272 = vld [vmem:[#allocation6 + $0x10] sm:$0xff]
        %v273 = vld [vmem:[#allocation6 + $0x18] sm:$0xff]
        %v274 = vld [vmem:[#allocation6 + $0x20] sm:$0xff]
        %v275 = vld [vmem:[#allocation6 + $0x28] sm:$0xff]
        %v276 = vld [vmem:[#allocation6 + $0x30] sm:$0xff]
        %v277 = vld [vmem:[#allocation6 + $0x38] sm:$0xff]
        %v278 = vld [vmem:[#allocation6 + $0x40] sm:$0xff]
        %v279 = vld [vmem:[#allocation6 + $0x48] sm:$0xff]
        %v280 = vld [vmem:[#allocation6 + $0x50] sm:$0xff]
        %v281 = vld [vmem:[#allocation6 + $0x58] sm:$0xff]
        %v282 = vld [vmem:[#allocation6 + $0x60] sm:$0xff]
        %v283 = vld [vmem:[#allocation6 + $0x68] sm:$0xff]
        %v284 = vld [vmem:[#allocation6 + $0x70] sm:$0xff]
        %v285 = vld [vmem:[#allocation6 + $0x78] sm:$0xff]
        %v286 = vld [vmem:[%s2] sm:$0x1]
        %v288 = vlaneseq
        %v289 = vshrl.u32 %v288, 7
        %v290 = vsub.s32 0, %v289
        %v291 = vrot.slane %v286, %v290
        %293 = vmatprep.subr.mxu0 0.0
        %294 = vmatpush1.msra.mxu0 %v285
        %295 = vmatprep.subr.mxu0 0.0
        %296 = vmatpush1.msra.mxu0 %v284
        %297 = vmatprep.subr.mxu0 0.0
        %298 = vmatpush1.msra.mxu0 %v283
        %299 = vmatprep.subr.mxu0 0.0
        %300 = vmatpush1.msra.mxu0 %v282
        %301 = vmatprep.subr.mxu0 0.0
        %302 = vmatpush1.msra.mxu0 %v281
        %303 = vmatprep.subr.mxu0 0.0
        %304 = vmatpush1.msra.mxu0 %v280
        %305 = vmatprep.subr.mxu0 0.0
        %306 = vmatpush1.msra.mxu0 %v279
        %307 = vmatprep.subr.mxu0 0.0
        %308 = vmatpush1.msra.mxu0 %v278
        %309 = vmatprep.subr.mxu0 0.0
        %310 = vmatpush1.msra.mxu0 %v277
        %311 = vmatprep.subr.mxu0 0.0
        %312 = vmatpush1.msra.mxu0 %v276
        %313 = vmatprep.subr.mxu0 0.0
        %314 = vmatpush1.msra.mxu0 %v275
        %315 = vmatprep.subr.mxu0 0.0
        %316 = vmatpush1.msra.mxu0 %v274
        %317 = vmatprep.subr.mxu0 0.0
        %318 = vmatpush1.msra.mxu0 %v273
        %319 = vmatprep.subr.mxu0 0.0
        %320 = vmatpush1.msra.mxu0 %v272
        %321 = vmatprep.subr.mxu0 0.0
        %322 = vmatpush1.msra.mxu0 %v271
        %323 = vmatprep.subr.mxu0 0.0
        %324 = vmatpush1.msra.mxu0 %v270
        %325 = vmatprep.subr.mxu0 0.0
        %326 = vmatpush2.msra.mxu0 0.0
        %327 = vmatprep.subr.mxu0 0.0
        %328 = vmatpush2.msra.mxu0 0.0
        %329 = vmatprep.subr.mxu0 0.0
        %330 = vmatpush2.msra.mxu0 0.0
        %331 = vmatprep.subr.mxu0 0.0
        %332 = vmatpush2.msra.mxu0 0.0
        %333 = vmatprep.subr.mxu0 0.0
        %334 = vmatpush2.msra.mxu0 0.0
        %335 = vmatprep.subr.mxu0 0.0
        %336 = vmatpush2.msra.mxu0 0.0
        %337 = vmatprep.subr.mxu0 0.0
        %338 = vmatpush2.msra.mxu0 0.0
        %339 = vmatprep.subr.mxu0 0.0
        %340 = vmatpush2.msra.mxu0 0.0
        %341 = vmatprep.subr.mxu0 0.0
        %342 = vmatpush2.msra.mxu0 0.0
        %343 = vmatprep.subr.mxu0 0.0
        %344 = vmatpush2.msra.mxu0 0.0
        %345 = vmatprep.subr.mxu0 0.0
        %346 = vmatpush2.msra.mxu0 0.0
        %347 = vmatprep.subr.mxu0 0.0
        %348 = vmatpush2.msra.mxu0 0.0
        %349 = vmatprep.subr.mxu0 0.0
        %350 = vmatpush2.msra.mxu0 0.0
        %351 = vmatprep.subr.mxu0 0.0
        %352 = vmatpush2.msra.mxu0 0.0
        %353 = vmatprep.subr.mxu0 0.0
        %354 = vmatpush2.msra.mxu0 0.0
        %355 = vmatprep.subr.mxu0 0.0
        %356 = vmatpush2.msra.mxu0 0.0
        %357 = vmatprep.mubr.f32.mxu0 0.0
        %358 = vmatmul.mubr.f32.gmra.mxu0 %v269
        %v359 = vpop.f32.mrf.mxu0
        %v360 = vadd.f32 %v291, %v359
        %v361 = vpop.f32.mrf.mxu0
        %362 = vdwg.mxu0
        %v363 = vmax.f32 %v360, 0.0
        %364 = vst [vmem:[#allocation2] sm:$0xff] %v363
        %v365 = vld [vmem:[#allocation2] sm:$0xff]
        %v366 = vld [vmem:[#allocation8] sm:$0xff]
        %v367 = vld [vmem:[#allocation8 + $0x8] sm:$0xff]
        %v368 = vld [vmem:[#allocation8 + $0x10] sm:$0xff]
        %v369 = vld [vmem:[#allocation8 + $0x18] sm:$0xff]
        %v370 = vld [vmem:[#allocation8 + $0x20] sm:$0xff]
        %v371 = vld [vmem:[#allocation8 + $0x28] sm:$0xff]
        %v372 = vld [vmem:[#allocation8 + $0x30] sm:$0xff]
        %v373 = vld [vmem:[#allocation8 + $0x38] sm:$0xff]
        %v374 = vld [vmem:[#allocation8 + $0x40] sm:$0xff]
        %v375 = vld [vmem:[#allocation8 + $0x48] sm:$0xff]
        %v376 = vld [vmem:[#allocation8 + $0x50] sm:$0xff]
        %v377 = vld [vmem:[#allocation8 + $0x58] sm:$0xff]
        %v378 = vld [vmem:[#allocation8 + $0x60] sm:$0xff]
        %v379 = vld [vmem:[#allocation8 + $0x68] sm:$0xff]
        %v380 = vld [vmem:[#allocation8 + $0x70] sm:$0xff]
        %v381 = vld [vmem:[#allocation8 + $0x78] sm:$0xff]
        %v382 = vld [vmem:[%s4] sm:$0x1]
        %v384 = vlaneseq
        %v385 = vshrl.u32 %v384, 7
        %v386 = vsub.s32 0, %v385
        %v387 = vrot.slane %v382, %v386
        %389 = vmatprep.subr.mxu0 0.0
        %390 = vmatpush1.msra.mxu0 %v381
        %391 = vmatprep.subr.mxu0 0.0
        %392 = vmatpush1.msra.mxu0 %v380
        %393 = vmatprep.subr.mxu0 0.0
        %394 = vmatpush1.msra.mxu0 %v379
        %395 = vmatprep.subr.mxu0 0.0
        %396 = vmatpush1.msra.mxu0 %v378
        %397 = vmatprep.subr.mxu0 0.0
        %398 = vmatpush1.msra.mxu0 %v377
        %399 = vmatprep.subr.mxu0 0.0
        %400 = vmatpush1.msra.mxu0 %v376
        %401 = vmatprep.subr.mxu0 0.0
        %402 = vmatpush1.msra.mxu0 %v375
        %403 = vmatprep.subr.mxu0 0.0
        %404 = vmatpush1.msra.mxu0 %v374
        %405 = vmatprep.subr.mxu0 0.0
        %406 = vmatpush1.msra.mxu0 %v373
        %407 = vmatprep.subr.mxu0 0.0
        %408 = vmatpush1.msra.mxu0 %v372
        %409 = vmatprep.subr.mxu0 0.0
        %410 = vmatpush1.msra.mxu0 %v371
        %411 = vmatprep.subr.mxu0 0.0
        %412 = vmatpush1.msra.mxu0 %v370
        %413 = vmatprep.subr.mxu0 0.0
        %414 = vmatpush1.msra.mxu0 %v369
        %415 = vmatprep.subr.mxu0 0.0
        %416 = vmatpush1.msra.mxu0 %v368
        %417 = vmatprep.subr.mxu0 0.0
        %418 = vmatpush1.msra.mxu0 %v367
        %419 = vmatprep.subr.mxu0 0.0
        %420 = vmatpush1.msra.mxu0 %v366
        %421 = vmatprep.subr.mxu0 0.0
        %422 = vmatpush2.msra.mxu0 0.0
        %423 = vmatprep.subr.mxu0 0.0
        %424 = vmatpush2.msra.mxu0 0.0
        %425 = vmatprep.subr.mxu0 0.0
        %426 = vmatpush2.msra.mxu0 0.0
        %427 = vmatprep.subr.mxu0 0.0
        %428 = vmatpush2.msra.mxu0 0.0
        %429 = vmatprep.subr.mxu0 0.0
        %430 = vmatpush2.msra.mxu0 0.0
        %431 = vmatprep.subr.mxu0 0.0
        %432 = vmatpush2.msra.mxu0 0.0
        %433 = vmatprep.subr.mxu0 0.0
        %434 = vmatpush2.msra.mxu0 0.0
        %435 = vmatprep.subr.mxu0 0.0
        %436 = vmatpush2.msra.mxu0 0.0
        %437 = vmatprep.subr.mxu0 0.0
        %438 = vmatpush2.msra.mxu0 0.0
        %439 = vmatprep.subr.mxu0 0.0
        %440 = vmatpush2.msra.mxu0 0.0
        %441 = vmatprep.subr.mxu0 0.0
        %442 = vmatpush2.msra.mxu0 0.0
        %443 = vmatprep.subr.mxu0 0.0
        %444 = vmatpush2.msra.mxu0 0.0
        %445 = vmatprep.subr.mxu0 0.0
        %446 = vmatpush2.msra.mxu0 0.0
        %447 = vmatprep.subr.mxu0 0.0
        %448 = vmatpush2.msra.mxu0 0.0
        %449 = vmatprep.subr.mxu0 0.0
        %450 = vmatpush2.msra.mxu0 0.0
        %451 = vmatprep.subr.mxu0 0.0
        %452 = vmatpush2.msra.mxu0 0.0
        %453 = vmatprep.mubr.f32.mxu0 0.0
        %454 = vmatmul.mubr.f32.gmra.mxu0 %v365
        %v455 = vpop.f32.mrf.mxu0
        %v456 = vadd.f32 %v387, %v455
        %v457 = vpop.f32.mrf.mxu0
        %458 = vdwg.mxu0
        %459 = vst [vmem:[%s268] sm:$0xff] %v456
        %s460 = sand.u32 %s141, 1
        %s461 = scalar_lea.sflag [#allocation5], %s460
        %s462 = sand.u32 %s141, 1
        %s463 = smul.addr %s462, 8
        %s464 = scalar_lea.vmem [#allocation9], %s463
        // Predicated region
        $region53: #{tpu_custom_call.1} parent=39 // pred_check
          %p465 = pneg %p151
        $region54: #{tpu_custom_call.1} parent=39 // pred_check_branch
          %467 = sbr.rel (%p465) target = $region56
        $region55: #{tpu_custom_call.1} parent=39 // pred_region
          %s469 = ssub.s32 128, 128
          %470 = vsyncadd %s461, %s469
          %s471 = smul.addr %s23, 128
          %s472 = scalar_lea.hbm %s5, %s471
          %s474 = sshll.u32 %s464, 4
          %s475 = int_to_ptr.vmem [resolvable:$true] %s474
          %477 = dma.vmem_to_hbm [thread:$0]  %s475, 128, %s472, %s461
        $region56: #{tpu_custom_call.1} parent=39 // pred_fallthru
          _
      $region40: #{tpu_custom_call.1} parent=5 // pred_fallthru
        _
      %p478 = scmp.le.s32.totalorder 2, %s18
      // Predicated region
      $region57: #{tpu_custom_call.1} parent=5 // pred_check
        %p479 = pneg %p478
      $region58: #{tpu_custom_call.1} parent=5 // pred_check_branch
        %481 = sbr.rel (%p479) target = $region60
      $region59: #{tpu_custom_call.1} parent=5 // pred_region
        %s482 = ssub.s32 %s18, 2
        // Predicated region
        $region61: #{tpu_custom_call.1} parent=59 // pred_check
          %p483 = pneg %p157
        $region62: #{tpu_custom_call.1} parent=59 // pred_check_branch
          %485 = sbr.rel (%p483) target = $region64
        $region63: #{tpu_custom_call.1} parent=59 // pred_region
          %s486 = sand.u32 %s142, 1
          %s487 = scalar_lea.sflag [#allocation5], %s486
          %s488 = sand.u32 %s142, 1
          %s489 = smul.addr %s488, 8
          %s490 = scalar_lea.vmem [#allocation9], %s489
          %491 = dma.done %s487, 128
        $region64: #{tpu_custom_call.1} parent=59 // pred_fallthru
          _
      $region60: #{tpu_custom_call.1} parent=5 // pred_fallthru
        _
    $region6: #{tpu_custom_call.1} parent=1 // loop_footer
      %s22 = sadd.s32 1, %s18
    $region7: #{tpu_custom_call.1} parent=1 // loop_footer_branch
      %17 = sbr.rel target = $region3
    $region8: #{tpu_custom_call.1} parent=1 // loop_exit
      _
    %492 = vsyncpa [#allocation4], 1
    %s493 = scalar_lea.sflag [#allocation4], 1
    %494 = vsyncpa %s493, 1
    %495 = vsyncpa [#allocation7], 1
    %496 = vsyncpa [#allocation5], 1
    %s497 = scalar_lea.sflag [#allocation5], 1
    %498 = vsyncpa %s497, 1

</llo_original>
